<compile_context>
chip_gen: v6e
topology: v6e:2x2x1
jax: 0.10.0
libtpu: 0.0.40
codegen_flags: <defaults>
</compile_context>

<pallas_src>
import functools
import math

import jax
import jax.numpy as jnp
from jax.experimental import pallas as pl
from jax.experimental.pallas import tpu as pltpu

_PI = 3.14159265  # same constant as the reference implementation


def _round_up(n, mult):
    return ((n + mult - 1) // mult) * mult


def _cos_m_theta(c, m):
    # Chebyshev polynomials: cos(theta) -> cos(m*theta) (the `mlambda` table).
    if m == 0:
        return jnp.ones_like(c)
    if m == 1:
        return c
    if m == 2:
        return 2.0 * c * c - 1.0
    if m == 3:
        return (4.0 * c * c - 3.0) * c
    if m == 4:
        c2 = c * c
        return 8.0 * c2 * (c2 - 1.0) + 1.0
    if m == 5:
        c2 = c * c
        return ((16.0 * c2 - 20.0) * c2 + 5.0) * c
    raise ValueError("m must be in [0, 5]")


def sphereface_kernel(xn_ref, wt_ref, winv_ref, xnorm_ref, label_ref, out_ref,
                      *, m, inv_one_plus_lamb, block_c):
    """Grid = (class tiles [outer, parallel], batch tiles [inner, arbitrary])."""
    c_idx = pl.program_id(0)

    # ---- cos_theta for this (batch tile, class tile): bf16 x bf16 -> f32 MXU.
    xn = xn_ref[...]                                             # (tb, D) bf16
    wt = wt_ref[...]                                             # (D, tc) bf16 (raw cols)
    cos = jnp.dot(xn, wt, preferred_element_type=jnp.float32)    # (tb, tc) f32
    cos = cos * winv_ref[...]                 # per-column 1/||w_j|| scale, (1, tc)
    cos = jnp.clip(cos, -1.0, 1.0)

    # ---- label mask for this class tile (no full-tile f32 one_hot).
    lab = label_ref[...]                                         # (tb, 1) int32
    col = (jax.lax.broadcasted_iota(jnp.int32, (1, cos.shape[1]), 1)
           + c_idx * block_c)                                    # (1, tc)
    mask = col == lab                                            # (tb, tc) bool

    # ---- margin term only for the label column (f32 throughout; v5e-safe).
    cos_lab = jnp.sum(jnp.where(mask, cos, 0.0), axis=-1, keepdims=True)  # (tb, 1)
    cos_m = _cos_m_theta(cos_lab, m)
    # k = floor(m * acos(c) / pi) via monotone thresholds (no acos on-chip):
    #   k >= j  <=>  c <= cos(j*pi/m).   phi is continuous across thresholds,
    #   so float rounding at the boundaries is harmless.
    k = jnp.zeros_like(cos_lab)
    for j in range(1, m + 1):
        k = k + (cos_lab <= math.cos(j * _PI / m)).astype(jnp.float32)
    sign = 1.0 - 2.0 * (k - 2.0 * jnp.floor(k * 0.5))            # (-1)^k
    phi = sign * cos_m - 2.0 * k
    delta = (phi - cos_lab) * inv_one_plus_lamb                  # (tb, 1)

    # Rows whose label is not in this class tile have mask == False everywhere,
    # so the (garbage) delta computed from cos_lab == 0 is never selected.
    x_norm = xnorm_ref[...]                                      # (tb, 1) f32
    out_ref[...] = (jnp.where(mask, cos + delta, cos) * x_norm).astype(out_ref.dtype)


def sphereface_forward(x, weight, label, *, m=4, iter_count=1,
                       block_b=None, block_c=None, out_dtype=jnp.float32):
    """One forward call of SphereFace (iter_count plays the role of self.iter)."""
    base, gamma, power, lambda_min = 1000.0, 0.12, 1, 5.0
    lamb = max(lambda_min, base * (1.0 + gamma * iter_count) ** (-power))
    inv_one_plus_lamb = 1.0 / (1.0 + lamb)

    B, D = x.shape
    C, D2 = weight.shape
    assert D == D2

    # Defaults chosen to fit comfortably in every generation's VMEM (v7x has
    # only 64 MiB); grow block_b / block_c toward 128 MiB on v5e/v6e if needed.
    tb = block_b or min(_round_up(B, 8), 256)        # batch tile (sublane mult of 8)
    tc = block_c or min(_round_up(C, 128), 2048)     # class tile (lane-dense mult of 128)
    Bp = _round_up(B, tb)
    Cp = _round_up(C, tc)

    # ---- host-side (XLA) preprocessing: essentially free vs. the matmul.
    # Normalized features in bf16 (MXU operand) + per-row L2 norm in f32.
    x32 = x.astype(jnp.float32)
    x_norm = jnp.sqrt(jnp.sum(x32 * x32, axis=1, keepdims=True))          # (B, 1)
    xn = (x32 / jnp.maximum(x_norm, 1e-12)).astype(jnp.bfloat16)          # (B, D)

    # Per-class inverse L2 norm of the weight rows (f32), applied as a cheap
    # per-column scale to cos_theta inside the kernel.
    w32 = weight.astype(jnp.float32)
    w_inv = 1.0 / jnp.maximum(jnp.sqrt(jnp.sum(w32 * w32, axis=1)), 1e-12)  # (C,)

    # Weight pre-transposed to (D, C) bf16 on the host: plain (tb,D)x(D,tc)
    # contraction in-kernel, no risk of an XLU transpose per class tile.
    w_t = weight.astype(jnp.bfloat16).T                                    # (D, C)
    if Cp != C:
        w_t = jnp.pad(w_t, ((0, 0), (0, Cp - C)))
        w_inv = jnp.pad(w_inv, (0, Cp - C))
    w_inv = w_inv.reshape(1, Cp)

    labp = label.astype(jnp.int32)
    if Bp != B:
        xn = jnp.pad(xn, ((0, Bp - B), (0, 0)))
        x_norm = jnp.pad(x_norm, ((0, Bp - B), (0, 0)))
        labp = jnp.pad(labp, (0, Bp - B), constant_values=-1)
    lab2d = labp.reshape(Bp, 1)

    # Grid: class tiles OUTER (parallel, many tiles -> v7x megacore), batch
    # tiles INNER.  The W block index only changes on the outer axis, so each
    # (D, tc) weight tile is DMA'd exactly once; the small xn / norm / label
    # tiles are what get re-streamed across class tiles.
    # TODO(synk): if xn also fits VMEM, make it fully resident (index_map
    # (0,0)) to drop even that small re-stream.
    grid = (Cp // tc, Bp // tb)

    kernel = functools.partial(
        sphereface_kernel, m=m,
        inv_one_plus_lamb=float(inv_one_plus_lamb), block_c=tc)

    # VMEM budget derived from the actual (double-buffered) tiles + headroom.
    out_itemsize = jnp.dtype(out_dtype).itemsize
    live_bytes = (
        2 * tb * D * 2              # xn tile (bf16)
        + 2 * D * tc * 2            # W tile (bf16)
        + 2 * 8 * tc * 4            # w_inv (1, tc) padded to 8 sublanes
        + 2 * tb * 128 * 4          # x_norm (tb, 1) padded to 128 lanes
        + 2 * tb * 128 * 4          # labels (tb, 1) padded to 128 lanes
        + 2 * tb * tc * out_itemsize)
    vmem_limit = min(int(live_bytes * 1.5) + (2 << 20), 64 << 20)

    cost = pl.CostEstimate(
        flops=2 * Bp * Cp * D,
        transcendentals=0,
        bytes_accessed=(Cp * D * 2                      # W streamed once
                        + (Cp // tc) * Bp * D * 2       # xn re-streamed per class tile
                        + Bp * Cp * out_itemsize        # output
                        + Cp * 4 + Bp * 8))             # w_inv, x_norm, labels

    out = pl.pallas_call(
        kernel,
        out_shape=jax.ShapeDtypeStruct((Bp, Cp), out_dtype),
        grid_spec=pltpu.PrefetchScalarGridSpec(
            num_scalar_prefetch=0,
            grid=grid,
            in_specs=[
                pl.BlockSpec((tb, D), lambda c, b: (b, 0)),   # xn (bf16, streamed)
                pl.BlockSpec((D, tc), lambda c, b: (0, c)),   # W^T tile (fetched once)
                pl.BlockSpec((1, tc), lambda c, b: (0, c)),   # 1/||w_j|| per class
                pl.BlockSpec((tb, 1), lambda c, b: (b, 0)),   # ||x|| per row
                pl.BlockSpec((tb, 1), lambda c, b: (b, 0)),   # labels
            ],
            out_specs=pl.BlockSpec((tb, tc), lambda c, b: (c * 0 + b, c))
            if False else pl.BlockSpec((tb, tc), lambda c, b: (b, c)),
        ),
        compiler_params=pltpu.CompilerParams(
            dimension_semantics=("parallel", "arbitrary"),
            vmem_limit_bytes=vmem_limit),
        cost_estimate=cost,
    )(xn, w_t, w_inv, x_norm, lab2d)

    return out[:B, :C]


def _reference_forward(x, weight, label, *, m=4, iter_count=1):
    # Pure-JAX (f32) mirror of the PyTorch forward, for a sanity check only.
    base, gamma, power, lambda_min = 1000.0, 0.12, 1, 5.0
    lamb = max(lambda_min, base * (1.0 + gamma * iter_count) ** (-power))
    x_norm = jnp.linalg.norm(x, axis=1, keepdims=True)
    xn = x / jnp.maximum(x_norm, 1e-12)
    wn = weight / jnp.maximum(jnp.linalg.norm(weight, axis=1, keepdims=True), 1e-12)
    cos_theta = jnp.clip(xn @ wn.T, -1.0, 1.0)
    cos_m = _cos_m_theta(cos_theta, m)
    theta = jnp.arccos(cos_theta)
    k = jnp.floor(m * theta / _PI)
    phi = (-1.0) ** k * cos_m - 2.0 * k
    one_hot = jax.nn.one_hot(label, weight.shape[0], dtype=jnp.float32)
    out = one_hot * (phi - cos_theta) / (1.0 + lamb) + cos_theta
    return out * x_norm


if __name__ == "__main__":
    # Small shapes that still exercise both grid axes (2 class tiles x 2 batch
    # tiles), the cross-tile label offset, and the label masking.
    B, in_features, out_features, m = 32, 128, 256, 4

    key = jax.random.PRNGKey(0)
    kx, kw, kl = jax.random.split(key, 3)

    x = jax.random.normal(kx, (B, in_features), dtype=jnp.float32)
    # xavier_uniform_ on weight of shape (out_features, in_features)
    bound = math.sqrt(6.0 / (in_features + out_features))
    weight = jax.random.uniform(
        kw, (out_features, in_features), minval=-bound, maxval=bound,
        dtype=jnp.float32)
    label = jax.random.randint(kl, (B,), 0, out_features, dtype=jnp.int32)

    out = sphereface_forward(x, weight, label, m=m, iter_count=1,
                             block_b=16, block_c=128)
    out = jax.block_until_ready(out)

    ref = _reference_forward(x, weight, label, m=m, iter_count=1)
    assert out.shape == (B, out_features)
    # bf16 MXU operands -> slightly looser tolerance vs the pure-f32 reference
    # (output magnitudes are O(||x||) ~ 11 here).
    assert jnp.allclose(out, ref, rtol=2e-2, atol=1e-1), "mismatch vs JAX reference"

    print("KERNEL_OK")
</pallas_src>

<mosaic_0001>
module attributes {stable_mosaic.version = 11 : i64} {
  func.func @sphereface_kernel(%arg0: i32, %arg1: i32, %arg2: memref<16x128xbf16, #tpu.memory_space<vmem>>, %arg3: memref<128x128xbf16, #tpu.memory_space<vmem>>, %arg4: memref<1x128xf32, #tpu.memory_space<vmem>>, %arg5: memref<16x1xf32, #tpu.memory_space<vmem>>, %arg6: memref<16x1xi32, #tpu.memory_space<vmem>>, %arg7: memref<16x128xf32, #tpu.memory_space<vmem>>) attributes {dimension_semantics = [#tpu.dimension_semantics<parallel>, #tpu.dimension_semantics<arbitrary>], iteration_bounds = array<i64: 2, 2>, scalar_prefetch = 0 : i64, scratch_operands = 0 : i64, tpu.core_type = #tpu.core_type<tc>, window_params = [{transform_indices = @transform_0, window_bounds = array<i64: 16, 128>}, {transform_indices = @transform_1, window_bounds = array<i64: 128, 128>}, {transform_indices = @transform_2, window_bounds = array<i64: 1, 128>}, {transform_indices = @transform_3, window_bounds = array<i64: 16, 1>}, {transform_indices = @transform_4, window_bounds = array<i64: 16, 1>}, {transform_indices = @transform_5, window_bounds = array<i64: 16, 128>}]} {
    %c0 = arith.constant 0 : index
    %c0_0 = arith.constant 0 : index
    %0 = vector.load %arg2[%c0, %c0_0] : memref<16x128xbf16, #tpu.memory_space<vmem>>, vector<16x128xbf16>
    %c0_1 = arith.constant 0 : index
    %c0_2 = arith.constant 0 : index
    %1 = vector.load %arg3[%c0_1, %c0_2] : memref<128x128xbf16, #tpu.memory_space<vmem>>, vector<128x128xbf16>
    %cst = arith.constant dense<0.000000e+00> : vector<16x128xf32>
    %2 = tpu.matmul %0, %1, %cst {dimension_numbers = #tpu.dot_dimension_numbers<[1], [0], [0], [1], [0, 0, 1, 1], [], []>} : vector<16x128xbf16>, vector<128x128xbf16>, vector<16x128xf32> -> vector<16x128xf32>
    %c0_3 = arith.constant 0 : index
    %c0_4 = arith.constant 0 : index
    %3 = vector.load %arg4[%c0_3, %c0_4] : memref<1x128xf32, #tpu.memory_space<vmem>>, vector<1x128xf32>
    %4 = vector.broadcast %3 : vector<1x128xf32> to vector<16x128xf32>
    %5 = arith.mulf %2, %4 : vector<16x128xf32>
    %cst_5 = arith.constant -1.000000e+00 : f32
    %cst_6 = arith.constant 1.000000e+00 : f32
    %6 = vector.broadcast %cst_5 : f32 to vector<16x128xf32>
    %7 = arith.maximumf %6, %5 : vector<16x128xf32>
    %8 = vector.broadcast %cst_6 : f32 to vector<16x128xf32>
    %9 = arith.minimumf %8, %7 : vector<16x128xf32>
    %c0_7 = arith.constant 0 : index
    %c0_8 = arith.constant 0 : index
    %10 = vector.load %arg6[%c0_7, %c0_8] : memref<16x1xi32, #tpu.memory_space<vmem>>, vector<16x1xi32>
    %11 = tpu.iota {dimensions = array<i32: 1>} : vector<1x128xi32>
    %c128_i32 = arith.constant 128 : i32
    %12 = arith.muli %arg0, %c128_i32 : i32
    %13 = vector.broadcast %12 : i32 to vector<1x128xi32>
    %14 = arith.addi %11, %13 : vector<1x128xi32>
    %15 = vector.broadcast %14 : vector<1x128xi32> to vector<16x128xi32>
    %16 = vector.broadcast %10 : vector<16x1xi32> to vector<16x128xi32>
    %17 = arith.cmpi eq, %15, %16 : vector<16x128xi32>
    %cst_9 = arith.constant 0.000000e+00 : f32
    %18 = vector.broadcast %cst_9 : f32 to vector<16x128xf32>
    %19 = arith.select %17, %9, %18 : vector<16x128xi1>, vector<16x128xf32>
    %cst_10 = arith.constant dense<0.000000e+00> : vector<16xf32>
    %20 = vector.multi_reduction <add>, %19, %cst_10 [1] : vector<16x128xf32> to vector<16xf32>
    %21 = vector.shape_cast %20 : vector<16xf32> to vector<16x1xf32>
    %22 = arith.mulf %21, %21 : vector<16x1xf32>
    %cst_11 = arith.constant 8.000000e+00 : f32
    %23 = vector.broadcast %cst_11 : f32 to vector<16x1xf32>
    %24 = arith.mulf %23, %22 : vector<16x1xf32>
    %cst_12 = arith.constant 1.000000e+00 : f32
    %25 = vector.broadcast %cst_12 : f32 to vector<16x1xf32>
    %26 = arith.subf %22, %25 : vector<16x1xf32>
    %27 = arith.mulf %24, %26 : vector<16x1xf32>
    %cst_13 = arith.constant 1.000000e+00 : f32
    %28 = vector.broadcast %cst_13 : f32 to vector<16x1xf32>
    %29 = arith.addf %27, %28 : vector<16x1xf32>
    %cst_14 = arith.constant 0.000000e+00 : f32
    %30 = vector.broadcast %cst_14 : f32 to vector<16x1xf32>
    %cst_15 = arith.constant 0.707106769 : f32
    %31 = vector.broadcast %cst_15 : f32 to vector<16x1xf32>
    %32 = arith.cmpf ole, %21, %31 : vector<16x1xf32>
    %33 = arith.extui %32 : vector<16x1xi1> to vector<16x1xi32>
    %34 = arith.sitofp %33 : vector<16x1xi32> to vector<16x1xf32>
    %35 = arith.addf %30, %34 : vector<16x1xf32>
    %cst_16 = arith.constant 1.79489656E-9 : f32
    %36 = vector.broadcast %cst_16 : f32 to vector<16x1xf32>
    %37 = arith.cmpf ole, %21, %36 : vector<16x1xf32>
    %38 = arith.extui %37 : vector<16x1xi1> to vector<16x1xi32>
    %39 = arith.sitofp %38 : vector<16x1xi32> to vector<16x1xf32>
    %40 = arith.addf %35, %39 : vector<16x1xf32>
    %cst_17 = arith.constant -0.707106769 : f32
    %41 = vector.broadcast %cst_17 : f32 to vector<16x1xf32>
    %42 = arith.cmpf ole, %21, %41 : vector<16x1xf32>
    %43 = arith.extui %42 : vector<16x1xi1> to vector<16x1xi32>
    %44 = arith.sitofp %43 : vector<16x1xi32> to vector<16x1xf32>
    %45 = arith.addf %40, %44 : vector<16x1xf32>
    %cst_18 = arith.constant -1.000000e+00 : f32
    %46 = vector.broadcast %cst_18 : f32 to vector<16x1xf32>
    %47 = arith.cmpf ole, %21, %46 : vector<16x1xf32>
    %48 = arith.extui %47 : vector<16x1xi1> to vector<16x1xi32>
    %49 = arith.sitofp %48 : vector<16x1xi32> to vector<16x1xf32>
    %50 = arith.addf %45, %49 : vector<16x1xf32>
    %cst_19 = arith.constant 5.000000e-01 : f32
    %51 = vector.broadcast %cst_19 : f32 to vector<16x1xf32>
    %52 = arith.mulf %50, %51 : vector<16x1xf32>
    %53 = math.floor %52 : vector<16x1xf32>
    %cst_20 = arith.constant 2.000000e+00 : f32
    %54 = vector.broadcast %cst_20 : f32 to vector<16x1xf32>
    %55 = arith.mulf %54, %53 : vector<16x1xf32>
    %56 = arith.subf %50, %55 : vector<16x1xf32>
    %cst_21 = arith.constant 2.000000e+00 : f32
    %57 = vector.broadcast %cst_21 : f32 to vector<16x1xf32>
    %58 = arith.mulf %57, %56 : vector<16x1xf32>
    %cst_22 = arith.constant 1.000000e+00 : f32
    %59 = vector.broadcast %cst_22 : f32 to vector<16x1xf32>
    %60 = arith.subf %59, %58 : vector<16x1xf32>
    %61 = arith.mulf %60, %29 : vector<16x1xf32>
    %cst_23 = arith.constant 2.000000e+00 : f32
    %62 = vector.broadcast %cst_23 : f32 to vector<16x1xf32>
    %63 = arith.mulf %62, %50 : vector<16x1xf32>
    %64 = arith.subf %61, %63 : vector<16x1xf32>
    %65 = arith.subf %64, %21 : vector<16x1xf32>
    %cst_24 = arith.constant 0.00111874705 : f32
    %66 = vector.broadcast %cst_24 : f32 to vector<16x1xf32>
    %67 = arith.mulf %65, %66 : vector<16x1xf32>
    %c0_25 = arith.constant 0 : index
    %c0_26 = arith.constant 0 : index
    %68 = vector.load %arg5[%c0_25, %c0_26] : memref<16x1xf32, #tpu.memory_space<vmem>>, vector<16x1xf32>
    %69 = vector.broadcast %67 : vector<16x1xf32> to vector<16x128xf32>
    %70 = arith.addf %9, %69 : vector<16x128xf32>
    %71 = arith.select %17, %70, %9 : vector<16x128xi1>, vector<16x128xf32>
    %72 = vector.broadcast %68 : vector<16x1xf32> to vector<16x128xf32>
    %73 = arith.mulf %71, %72 : vector<16x128xf32>
    %c0_27 = arith.constant 0 : index
    %c0_28 = arith.constant 0 : index
    %74 = vector.load %arg7[%c0_27, %c0_28] : memref<16x128xf32, #tpu.memory_space<vmem>>, vector<16x128xf32>
    tpu.vector_store %arg7[%c0_27, %c0_28], %73 {strides = array<i32>} : memref<16x128xf32, #tpu.memory_space<vmem>>, vector<16x128xf32>,
    return
  }
  func.func @transform_0(%arg0: i32, %arg1: i32) -> (i32, i32) {
    %c0_i32 = arith.constant 0 : i32
    %c0_i32_0 = arith.constant 0 : i32
    return %arg1, %c0_i32 : i32, i32
  }
  func.func @transform_1(%arg0: i32, %arg1: i32) -> (i32, i32) {
    %c0_i32 = arith.constant 0 : i32
    %c0_i32_0 = arith.constant 0 : i32
    return %c0_i32, %arg0 : i32, i32
  }
  func.func @transform_2(%arg0: i32, %arg1: i32) -> (i32, i32) {
    %c0_i32 = arith.constant 0 : i32
    %c0_i32_0 = arith.constant 0 : i32
    return %c0_i32, %arg0 : i32, i32
  }
  func.func @transform_3(%arg0: i32, %arg1: i32) -> (i32, i32) {
    %c0_i32 = arith.constant 0 : i32
    %c0_i32_0 = arith.constant 0 : i32
    return %arg1, %c0_i32 : i32, i32
  }
  func.func @transform_4(%arg0: i32, %arg1: i32) -> (i32, i32) {
    %c0_i32 = arith.constant 0 : i32
    %c0_i32_0 = arith.constant 0 : i32
    return %arg1, %c0_i32 : i32, i32
  }
  func.func @transform_5(%arg0: i32, %arg1: i32) -> (i32, i32) {
    %c0_i32 = arith.constant 0 : i32
    return %arg1, %arg0 : i32, i32
  }
}

</mosaic_0001>

<llo_original>
// kernel: tpu_custom_call.1
$region0: #{tpu_custom_call.1}
  #allocation0 [shape = 'u32[]', space=smem, size = 0x4, offset = 0x4, fixed_abs, tag = 'smem constant byte address 0x4 - core index']
  #allocation1 [shape = 'u32[144,128]{1,0:T(1,128)}', space=vmem, size = 0x12000, scoped, tag = 'internal scratch']
  %s0 = inlined_call_operand.vmem [shape: bf16[32,128], index: 0, kind: input, shape index: {}]
  %s1 = inlined_call_operand.hbm [shape: bf16[128,256], index: 1, kind: input, shape index: {}]
  %s2 = inlined_call_operand.vmem [shape: f32[1,256], index: 2, kind: input, shape index: {}]
  %s3 = inlined_call_operand.vmem [shape: f32[32,1], index: 3, kind: input, shape index: {}]
  %s4 = inlined_call_operand.vmem [shape: s32[32,1], index: 4, kind: input, shape index: {}]
  %s5 = inlined_call_operand.hbm [shape: f32[32,256], index: 5, kind: output, shape index: {}]
  %s6 = sld [smem:[#allocation0]]
  $region57: #{tpu_custom_call.1} parent=0
    _
  %s8 = ssub.s32 1, %s6
  %s9 = scalar_select 0, %s8, %s6
  $region1: #{tpu_custom_call.1} parent=0
    #allocation2 [shape = 'u8[65536]{0}', space=vmem, size = 0x10000, scoped, tag = 'input window, operand 1']
    #allocation3 [shape = 's32[2]{0}', space=sflag, size = 0x8, scoped, tag = 'scoped memory for tpu_custom_call.1']
    #allocation4 [shape = 's32[2]{0}', space=sflag, size = 0x8, scoped, tag = 'scoped memory for tpu_custom_call.1']
    #allocation5 [shape = 'u8[16384]{0}', space=vmem, size = 0x4000, scoped, tag = 'output window, operand 0']
    %10 = vsyncpa [#allocation3], 0
    %s11 = scalar_lea.sflag [#allocation3], 1
    %12 = vsyncpa %s11, 0
    %13 = vsyncpa [#allocation4], 0
    %s14 = scalar_lea.sflag [#allocation4], 1
    %15 = vsyncpa %s14, 0
    loop: start=0, step=1, limit=6
    $region2: #{tpu_custom_call.1} parent=1 // loop_pre_header
      _
    $region3: #{tpu_custom_call.1} parent=1 // loop_header
      %s17 = sphi 0, %s21
      %p18 = scmp.ge.s32.totalorder %s17, 6
      %s24 = sphi 0, %s36
      %s25 = sphi 0, %s32
      %s26 = sphi 0, %s24
      %s27 = sphi 0, %s25
      %s28 = sphi 0, %s26
      %s29 = sphi 0, %s27
      %s39 = sphi 0, %s41
      %s42 = sphi 0, %s39
      %s43 = sphi 0, %s42
      %s59 = sphi 0, %s43
      %s65 = sphi 0, %s67
      %s68 = sphi 0, %s65
      %s69 = sphi 0, %s68
      %s85 = sphi 0, %s69
      %s91 = sphi 0, %s93
      %s94 = sphi 0, %s91
      %s95 = sphi 0, %s94
      %s111 = sphi 0, %s95
      %s117 = sphi 0, %s119
      %s120 = sphi 0, %s117
      %s121 = sphi 0, %s120
      %s137 = sphi 0, %s121
      %s143 = sphi 0, %s145
      %s146 = sphi 0, %s143
      %s147 = sphi 0, %s146
      %s163 = sphi 0, %s147
      %s171 = sphi 0, %s173
      %s174 = sphi 0, %s171
      %s175 = sphi 0, %s174
      %s191 = sphi 0, %s175
    $region4: #{tpu_custom_call.1} parent=1 // loop_header_branch
      %20 = sbr.rel (%p18) target = $region8
    $region5: #{tpu_custom_call.1} parent=1 // loop_body
      %s22 = ssub.s32 %s17, 1
      %s23 = ssub.s32 %s17, 2
      %s30 = sadd.s32 1, %s25
      %p31 = scmp.ge.s32.totalorder %s30, 2
      %s32 = scalar_select %p31, 0, %s30
      %s33 = sadd.s32 1, %s24
      %s34 = scalar_select %p31, %s33, %s24
      %p35 = scmp.ge.s32.totalorder %s34, 2
      %s36 = scalar_select %p35, 0, %s34
      %s37 = ssub.s32 %s25, %s32
      %p38 = scmp.eq.s32.totalorder %s37, 0
      %s40 = sadd.s32 %s39, 1
      %s41 = scalar_select %p38, %s39, %s40
      %p44 = pneg %p38
      %p45 = scmp.eq.s32.totalorder %s17, 3
      %p46 = por %p44, %p45
      %p47 = scmp.ne.s32.totalorder %s39, %s42
      %p48 = scmp.eq.s32.totalorder %s17, 0
      %p49 = por %p47, %p48
      %p50 = scmp.ne.s32.totalorder %s39, %s42
      %p51 = scmp.eq.s32.totalorder %s22, 3
      %p52 = por %p50, %p51
      %p53 = scmp.ne.s32.totalorder %s42, %s43
      %p54 = scmp.eq.s32.totalorder %s22, 0
      %p55 = por %p53, %p54
      %p56 = scmp.ne.s32.totalorder %s42, %s43
      %p57 = scmp.eq.s32.totalorder %s23, 3
      %p58 = por %p56, %p57
      %p60 = scmp.ne.s32.totalorder %s43, %s59
      %p61 = scmp.eq.s32.totalorder %s23, 0
      %p62 = por %p60, %p61
      %s63 = ssub.s32 %s24, %s36
      %p64 = scmp.eq.s32.totalorder %s63, 0
      %s66 = sadd.s32 %s65, 1
      %s67 = scalar_select %p64, %s65, %s66
      %p70 = pneg %p64
      %p71 = scmp.eq.s32.totalorder %s17, 3
      %p72 = por %p70, %p71
      %p73 = scmp.ne.s32.totalorder %s65, %s68
      %p74 = scmp.eq.s32.totalorder %s17, 0
      %p75 = por %p73, %p74
      %p76 = scmp.ne.s32.totalorder %s65, %s68
      %p77 = scmp.eq.s32.totalorder %s22, 3
      %p78 = por %p76, %p77
      %p79 = scmp.ne.s32.totalorder %s68, %s69
      %p80 = scmp.eq.s32.totalorder %s22, 0
      %p81 = por %p79, %p80
      %p82 = scmp.ne.s32.totalorder %s68, %s69
      %p83 = scmp.eq.s32.totalorder %s23, 3
      %p84 = por %p82, %p83
      %p86 = scmp.ne.s32.totalorder %s69, %s85
      %p87 = scmp.eq.s32.totalorder %s23, 0
      %p88 = por %p86, %p87
      %s89 = ssub.s32 %s24, %s36
      %p90 = scmp.eq.s32.totalorder %s89, 0
      %s92 = sadd.s32 %s91, 1
      %s93 = scalar_select %p90, %s91, %s92
      %p96 = pneg %p90
      %p97 = scmp.eq.s32.totalorder %s17, 3
      %p98 = por %p96, %p97
      %p99 = scmp.ne.s32.totalorder %s91, %s94
      %p100 = scmp.eq.s32.totalorder %s17, 0
      %p101 = por %p99, %p100
      %p102 = scmp.ne.s32.totalorder %s91, %s94
      %p103 = scmp.eq.s32.totalorder %s22, 3
      %p104 = por %p102, %p103
      %p105 = scmp.ne.s32.totalorder %s94, %s95
      %p106 = scmp.eq.s32.totalorder %s22, 0
      %p107 = por %p105, %p106
      %p108 = scmp.ne.s32.totalorder %s94, %s95
      %p109 = scmp.eq.s32.totalorder %s23, 3
      %p110 = por %p108, %p109
      %p112 = scmp.ne.s32.totalorder %s95, %s111
      %p113 = scmp.eq.s32.totalorder %s23, 0
      %p114 = por %p112, %p113
      %s115 = ssub.s32 %s25, %s32
      %p116 = scmp.eq.s32.totalorder %s115, 0
      %s118 = sadd.s32 %s117, 1
      %s119 = scalar_select %p116, %s117, %s118
      %p122 = pneg %p116
      %p123 = scmp.eq.s32.totalorder %s17, 3
      %p124 = por %p122, %p123
      %p125 = scmp.ne.s32.totalorder %s117, %s120
      %p126 = scmp.eq.s32.totalorder %s17, 0
      %p127 = por %p125, %p126
      %p128 = scmp.ne.s32.totalorder %s117, %s120
      %p129 = scmp.eq.s32.totalorder %s22, 3
      %p130 = por %p128, %p129
      %p131 = scmp.ne.s32.totalorder %s120, %s121
      %p132 = scmp.eq.s32.totalorder %s22, 0
      %p133 = por %p131, %p132
      %p134 = scmp.ne.s32.totalorder %s120, %s121
      %p135 = scmp.eq.s32.totalorder %s23, 3
      %p136 = por %p134, %p135
      %p138 = scmp.ne.s32.totalorder %s121, %s137
      %p139 = scmp.eq.s32.totalorder %s23, 0
      %p140 = por %p138, %p139
      %s141 = ssub.s32 %s25, %s32
      %p142 = scmp.eq.s32.totalorder %s141, 0
      %s144 = sadd.s32 %s143, 1
      %s145 = scalar_select %p142, %s143, %s144
      %p148 = pneg %p142
      %p149 = scmp.eq.s32.totalorder %s17, 3
      %p150 = por %p148, %p149
      %p151 = scmp.ne.s32.totalorder %s143, %s146
      %p152 = scmp.eq.s32.totalorder %s17, 0
      %p153 = por %p151, %p152
      %p154 = scmp.ne.s32.totalorder %s143, %s146
      %p155 = scmp.eq.s32.totalorder %s22, 3
      %p156 = por %p154, %p155
      %p157 = scmp.ne.s32.totalorder %s146, %s147
      %p158 = scmp.eq.s32.totalorder %s22, 0
      %p159 = por %p157, %p158
      %p160 = scmp.ne.s32.totalorder %s146, %s147
      %p161 = scmp.eq.s32.totalorder %s23, 3
      %p162 = por %p160, %p161
      %p164 = scmp.ne.s32.totalorder %s147, %s163
      %p165 = scmp.eq.s32.totalorder %s23, 0
      %p166 = por %p164, %p165
      %s167 = ssub.s32 %s25, %s32
      %s168 = ssub.s32 %s24, %s36
      %s169 = sor.u32 %s167, %s168
      %p170 = scmp.eq.s32.totalorder %s169, 0
      %s172 = sadd.s32 %s171, 1
      %s173 = scalar_select %p170, %s171, %s172
      %p176 = pneg %p170
      %p177 = scmp.eq.s32.totalorder %s17, 3
      %p178 = por %p176, %p177
      %p179 = scmp.ne.s32.totalorder %s171, %s174
      %p180 = scmp.eq.s32.totalorder %s17, 0
      %p181 = por %p179, %p180
      %p182 = scmp.ne.s32.totalorder %s171, %s174
      %p183 = scmp.eq.s32.totalorder %s22, 3
      %p184 = por %p182, %p183
      %p185 = scmp.ne.s32.totalorder %s174, %s175
      %p186 = scmp.eq.s32.totalorder %s22, 0
      %p187 = por %p185, %p186
      %p188 = scmp.ne.s32.totalorder %s174, %s175
      %p189 = scmp.eq.s32.totalorder %s23, 3
      %p190 = por %p188, %p189
      %p192 = scmp.ne.s32.totalorder %s175, %s191
      %p193 = scmp.eq.s32.totalorder %s23, 0
      %p194 = por %p192, %p193
      %p195 = scmp.le.s32.totalorder 1, %s17
      %p196 = scmp.lt.s32.totalorder %s17, 5
      %p197 = pnand %p195, %p196
      %p198 = pneg %p197
      // Predicated region
      $region9: #{tpu_custom_call.1} parent=5 // pred_check
        _
      $region10: #{tpu_custom_call.1} parent=5 // pred_check_branch
        %200 = sbr.rel (%p197) target = $region12
      $region11: #{tpu_custom_call.1} parent=5 // pred_region
        %s201 = ssub.s32 %s17, 1
      $region12: #{tpu_custom_call.1} parent=5 // pred_fallthru
        _
      %p202 = scmp.lt.s32.totalorder %s17, 4
      // Predicated region
      $region13: #{tpu_custom_call.1} parent=5 // pred_check
        %p203 = pneg %p202
      $region14: #{tpu_custom_call.1} parent=5 // pred_check_branch
        %205 = sbr.rel (%p203) target = $region16
      $region15: #{tpu_custom_call.1} parent=5 // pred_region
        // Predicated region
        $region17: #{tpu_custom_call.1} parent=15 // pred_check
          %p206 = pneg %p49
        $region18: #{tpu_custom_call.1} parent=15 // pred_check_branch
          %208 = sbr.rel (%p206) target = $region20
        $region19: #{tpu_custom_call.1} parent=15 // pred_region
          %s209 = smul.u32 2, %s25
          %p210 = scmp.lt.s32.totalorder %s209, 3
          %s211 = scalar_select %p210, %s209, 3
          %s212 = smul.addr %s211, 4
          %s213 = scalar_lea.vmem %s0, %s212
          %s214 = smul.u32 2, %s25
        $region20: #{tpu_custom_call.1} parent=15 // pred_fallthru
          _
        // Predicated region
        $region21: #{tpu_custom_call.1} parent=15 // pred_check
          %p215 = pneg %p75
        $region22: #{tpu_custom_call.1} parent=15 // pred_check_branch
          %217 = sbr.rel (%p215) target = $region24
        $region23: #{tpu_custom_call.1} parent=15 // pred_region
          %s218 = sand.u32 %s65, 1
          %s219 = scalar_lea.sflag [#allocation3], %s218
          %s220 = sand.u32 %s65, 1
          %s221 = smul.addr %s220, 64
          %s222 = scalar_lea.vmem [#allocation2], %s221
          %s224 = ssub.s32 1024, 1024
          %225 = vsyncadd %s219, %s224
          %s226 = smul.addr %s24, 64
          %s227 = scalar_lea.hbm %s1, %s226
          %s228 = sshll.u32 %s222, 4
          %s229 = int_to_ptr.vmem [resolvable:$true] %s228
          %234 = dma.hbm_to_vmem [thread:$0]  %s227, 1024, %s229, %s219, 128, 64, 4
        $region24: #{tpu_custom_call.1} parent=15 // pred_fallthru
          _
        // Predicated region
        $region25: #{tpu_custom_call.1} parent=15 // pred_check
          %p235 = pneg %p101
        $region26: #{tpu_custom_call.1} parent=15 // pred_check_branch
          %237 = sbr.rel (%p235) target = $region28
        $region27: #{tpu_custom_call.1} parent=15 // pred_region
          %p238 = scmp.lt.s32.totalorder %s24, 1
          %s239 = scalar_select %p238, %s24, 1
          %s240 = scalar_lea.vmem %s2, %s239
        $region28: #{tpu_custom_call.1} parent=15 // pred_fallthru
          _
        // Predicated region
        $region29: #{tpu_custom_call.1} parent=15 // pred_check
          %p241 = pneg %p127
        $region30: #{tpu_custom_call.1} parent=15 // pred_check_branch
          %243 = sbr.rel (%p241) target = $region32
        $region31: #{tpu_custom_call.1} parent=15 // pred_region
          %s244 = smul.u32 2, %s25
          %p245 = scmp.lt.s32.totalorder %s244, 3
          %s246 = scalar_select %p245, %s244, 3
          %s247 = smul.addr %s246, 8
          %s248 = scalar_lea.vmem %s3, %s247
          %s249 = smul.u32 2, %s25
        $region32: #{tpu_custom_call.1} parent=15 // pred_fallthru
          _
        // Predicated region
        $region33: #{tpu_custom_call.1} parent=15 // pred_check
          %p250 = pneg %p153
        $region34: #{tpu_custom_call.1} parent=15 // pred_check_branch
          %252 = sbr.rel (%p250) target = $region36
        $region35: #{tpu_custom_call.1} parent=15 // pred_region
          %s253 = smul.u32 2, %s25
          %p254 = scmp.lt.s32.totalorder %s253, 3
          %s255 = scalar_select %p254, %s253, 3
          %s256 = smul.addr %s255, 8
          %s257 = scalar_lea.vmem %s4, %s256
          %s258 = smul.u32 2, %s25
        $region36: #{tpu_custom_call.1} parent=15 // pred_fallthru
          _
      $region16: #{tpu_custom_call.1} parent=5 // pred_fallthru
        _
      %p259 = scmp.le.s32.totalorder 1, %s17
      %p260 = scmp.lt.s32.totalorder %s17, 5
      %p261 = pnand %p259, %p260
      %p262 = pneg %p261
      // Predicated region
      $region37: #{tpu_custom_call.1} parent=5 // pred_check
        _
      $region38: #{tpu_custom_call.1} parent=5 // pred_check_branch
        %264 = sbr.rel (%p261) target = $region40
      $region39: #{tpu_custom_call.1} parent=5 // pred_region
        %s265 = ssub.s32 %s17, 1
        %s266 = sand.u32 %s68, 1
        %s267 = scalar_lea.sflag [#allocation3], %s266
        %s268 = sand.u32 %s68, 1
        %s269 = smul.addr %s268, 64
        %s270 = scalar_lea.vmem [#allocation2], %s269
        // Predicated region
        $region41: #{tpu_custom_call.1} parent=39 // pred_check
          %p271 = pneg %p81
        $region42: #{tpu_custom_call.1} parent=39 // pred_check_branch
          %273 = sbr.rel (%p271) target = $region44
        $region43: #{tpu_custom_call.1} parent=39 // pred_region
          %274 = dma.done %s267, 1024
        $region44: #{tpu_custom_call.1} parent=39 // pred_fallthru
          _
        %s275 = smul.u32 2, %s27
        %p276 = scmp.lt.s32.totalorder %s275, 3
        %s277 = scalar_select %p276, %s275, 3
        %s278 = smul.addr %s277, 4
        %s279 = scalar_lea.vmem %s0, %s278
        %p280 = pneg %p55
        %p281 = pneg %p52
        %s282 = sand.u32 %s68, 1
        %s283 = scalar_lea.sflag [#allocation3], %s282
        %s284 = sand.u32 %s68, 1
        %s285 = smul.addr %s284, 64
        %s286 = scalar_lea.vmem [#allocation2], %s285
        %p287 = pneg %p81
        %p288 = pneg %p78
        %p289 = scmp.lt.s32.totalorder %s26, 1
        %s290 = scalar_select %p289, %s26, 1
        %s291 = scalar_lea.vmem %s2, %s290
        %p292 = pneg %p107
        %p293 = pneg %p104
        %s294 = smul.u32 2, %s27
        %p295 = scmp.lt.s32.totalorder %s294, 3
        %s296 = scalar_select %p295, %s294, 3
        %s297 = smul.addr %s296, 8
        %s298 = scalar_lea.vmem %s3, %s297
        %p299 = pneg %p133
        %p300 = pneg %p130
        %s301 = smul.u32 2, %s27
        %p302 = scmp.lt.s32.totalorder %s301, 3
        %s303 = scalar_select %p302, %s301, 3
        %s304 = smul.addr %s303, 8
        %s305 = scalar_lea.vmem %s4, %s304
        %p306 = pneg %p159
        %p307 = pneg %p156
        %p308 = pneg %p187
        %p309 = pneg %p184
        %s310 = sand.u32 %s174, 1
        %s311 = scalar_lea.sflag [#allocation4], %s310
        %s312 = sand.u32 %s174, 1
        %s313 = smul.addr %s312, 16
        %s314 = scalar_lea.vmem [#allocation5], %s313
        %s315 = smul.u32 2, %s27
        %p316 = scmp.lt.s32.totalorder %s315, 3
        %s317 = scalar_select %p316, %s315, 3
        %s318 = smul.addr %s317, 4
        %s319 = scalar_lea.vmem %s0, %s318
        %s320 = smul.u32 2, %s27
        %p321 = scmp.lt.s32.totalorder %s26, 1
        %s322 = scalar_select %p321, %s26, 1
        %s323 = scalar_lea.vmem %s2, %s322
        %s324 = smul.u32 2, %s27
        %p325 = scmp.lt.s32.totalorder %s324, 3
        %s326 = scalar_select %p325, %s324, 3
        %s327 = smul.addr %s326, 8
        %s328 = scalar_lea.vmem %s3, %s327
        %s329 = smul.u32 2, %s27
        %s330 = smul.u32 2, %s27
        %p331 = scmp.lt.s32.totalorder %s330, 3
        %s332 = scalar_select %p331, %s330, 3
        %s333 = smul.addr %s332, 8
        %s334 = scalar_lea.vmem %s4, %s333
        %s335 = smul.u32 2, %s27
        %s336 = smul.u32 2, %s27
        %v338 = vld [vmem:[%s319] sm:$0xf]
        %v339 = vld [vmem:[%s319 + $0x4] sm:$0xf]
        %v340 = vld [vmem:[%s270] sm:$0xf]
        %v341 = vld [vmem:[%s270 + $0x4] sm:$0xf]
        %v342 = vld [vmem:[%s270 + $0x8] sm:$0xf]
        %v343 = vld [vmem:[%s270 + $0xc] sm:$0xf]
        %v344 = vld [vmem:[%s270 + $0x10] sm:$0xf]
        %v345 = vld [vmem:[%s270 + $0x14] sm:$0xf]
        %v346 = vld [vmem:[%s270 + $0x18] sm:$0xf]
        %v347 = vld [vmem:[%s270 + $0x1c] sm:$0xf]
        %v348 = vld [vmem:[%s270 + $0x20] sm:$0xf]
        %v349 = vld [vmem:[%s270 + $0x24] sm:$0xf]
        %v350 = vld [vmem:[%s270 + $0x28] sm:$0xf]
        %v351 = vld [vmem:[%s270 + $0x2c] sm:$0xf]
        %v352 = vld [vmem:[%s270 + $0x30] sm:$0xf]
        %v353 = vld [vmem:[%s270 + $0x34] sm:$0xf]
        %v354 = vld [vmem:[%s270 + $0x38] sm:$0xf]
        %v355 = vld [vmem:[%s270 + $0x3c] sm:$0xf]
        %v358 = vunpack.c.l.b16 %v338
        %v359 = vunpack.c.l.b16 %v339
        %v360 = vpack.c.b16 %v359, %v358
        %v378 = vunpack.c.l.b16 %v340
        %v379 = vunpack.c.l.b16 %v341
        %v380 = vunpack.c.l.b16 %v342
        %v381 = vunpack.c.l.b16 %v343
        %v382 = vunpack.c.l.b16 %v344
        %v383 = vunpack.c.l.b16 %v345
        %v384 = vunpack.c.l.b16 %v346
        %v385 = vunpack.c.l.b16 %v347
        %v386 = vunpack.c.l.b16 %v348
        %v387 = vunpack.c.l.b16 %v349
        %v388 = vunpack.c.l.b16 %v350
        %v389 = vunpack.c.l.b16 %v351
        %v390 = vunpack.c.l.b16 %v352
        %v391 = vunpack.c.l.b16 %v353
        %v392 = vunpack.c.l.b16 %v354
        %v393 = vunpack.c.l.b16 %v355
        %v394 = vpack.c.b16 %v379, %v378
        %v395 = vpack.c.b16 %v381, %v380
        %v396 = vpack.c.b16 %v383, %v382
        %v397 = vpack.c.b16 %v385, %v384
        %v398 = vpack.c.b16 %v387, %v386
        %v399 = vpack.c.b16 %v389, %v388
        %v400 = vpack.c.b16 %v391, %v390
        %v401 = vpack.c.b16 %v393, %v392
        %410 = vmatprep.subr.bf16.mxu0 0
        %411 = vmatpush1.bf16.msra.mxu0 %v401
        %412 = vmatprep.subr.bf16.mxu0 0
        %413 = vmatpush1.bf16.msra.mxu0 %v400
        %414 = vmatprep.subr.bf16.mxu0 0
        %415 = vmatpush1.bf16.msra.mxu0 %v399
        %416 = vmatprep.subr.bf16.mxu0 0
        %417 = vmatpush1.bf16.msra.mxu0 %v398
        %418 = vmatprep.subr.bf16.mxu0 0
        %419 = vmatpush1.bf16.msra.mxu0 %v397
        %420 = vmatprep.subr.bf16.mxu0 0
        %421 = vmatpush1.bf16.msra.mxu0 %v396
        %422 = vmatprep.subr.bf16.mxu0 0
        %423 = vmatpush1.bf16.msra.mxu0 %v395
        %424 = vmatprep.subr.bf16.mxu0 0
        %425 = vmatpush1.bf16.msra.mxu0 %v394
        %426 = vmatprep.subr.bf16.mxu0 0
        %427 = vmatpush2.bf16.msra.mxu0 0
        %428 = vmatprep.subr.bf16.mxu0 0
        %429 = vmatpush2.bf16.msra.mxu0 0
        %430 = vmatprep.subr.bf16.mxu0 0
        %431 = vmatpush2.bf16.msra.mxu0 0
        %432 = vmatprep.subr.bf16.mxu0 0
        %433 = vmatpush2.bf16.msra.mxu0 0
        %434 = vmatprep.subr.bf16.mxu0 0
        %435 = vmatpush2.bf16.msra.mxu0 0
        %436 = vmatprep.subr.bf16.mxu0 0
        %437 = vmatpush2.bf16.msra.mxu0 0
        %438 = vmatprep.subr.bf16.mxu0 0
        %439 = vmatpush2.bf16.msra.mxu0 0
        %440 = vmatprep.subr.bf16.mxu0 0
        %441 = vmatpush2.bf16.msra.mxu0 0
        %442 = vmatprep.mubr.bf16.mxu0 0
        %443 = vmatmul.mubr.bf16.gmra.mxu0 %v360
        %v444 = vpop.f32.mrf.mxu0
        %v445 = vadd.f32 0.0, %v444
        %v446 = vpop.f32.mrf.mxu0
        %v447 = vpop.f32.mrf.mxu0
        %v448 = vadd.f32 0.0, %v447
        %v449 = vpop.f32.mrf.mxu0
        %450 = vdwg.mxu0
        %v451 = vld [vmem:[%s323] sm:$0x1]
        %v453 = vlaneseq
        %v454 = vshrl.u32 %v453, 7
        %v455 = vsub.s32 0, %v454
        %v456 = vrot.slane %v451, %v455
        %v458 = vmul.f32 %v445, %v456
        %v459 = vmul.f32 %v448, %v456
        %v460 = vmax.f32 %v458, -1.0
        %v461 = vmax.f32 %v459, -1.0
        %v462 = vmin.f32 %v460, 1.0
        %v463 = vmin.f32 %v461, 1.0
        %v464 = vld [vmem:[%s334] sm:$0xff]
        %v465 = vld [vmem:[%s334 + $0x8] sm:$0xff]
        %v466 = vlaneseq
        %v467 = vand.u32 %v466, 127
        %s468 = smul.u32 %s26, 128
        %v469 = vstv %s468
        %v470 = vadd.s32 %v467, %v469
        %471 = vset.pattern.permute.xlu0 0
        %472 = vperm.xlu0 %471, %v464
        %v473 = vpop.permute.xlu0 %472
        %474 = vset.pattern.permute.xlu0 0
        %475 = vperm.xlu0 %474, %v465
        %v476 = vpop.permute.xlu0 %475
        %vm477 = vcmp.eq.s32.totalorder %v470, %v473
        %vm478 = vcmp.eq.s32.totalorder %v470, %v476
        %v479 = vsel %vm477, %v462, 0.0
        %v480 = vsel %vm478, %v463, 0.0
        %481 = vadd.xlane.f32.xlu0 %v479
        %v482 = vpop.xlane.xlu0 %481
        %483 = vadd.xlane.f32.xlu0 %v480
        %v484 = vpop.xlane.xlu0 %483
        %v485 = vmul.f32 %v482, %v482
        %v486 = vmul.f32 %v484, %v484
        %v487 = vmul.f32 %v485, 8.0
        %v488 = vmul.f32 %v486, 8.0
        %v489 = vsub.f32 %v485, 1.0
        %v490 = vsub.f32 %v486, 1.0
        %v491 = vmul.f32 %v487, %v489
        %v492 = vmul.f32 %v488, %v490
        %v493 = vadd.f32 %v491, 1.0
        %v494 = vadd.f32 %v492, 1.0
        %vm495 = vcmp.le.f32.partialorder %v482, 0.70710677
        %vm496 = vcmp.le.f32.partialorder %v484, 0.70710677
        %v497 = vsel %vm495, 1, 0
        %v498 = vsel %vm496, 1, 0
        %v499 = vcvt.s32.f32 %v497
        %v500 = vcvt.s32.f32 %v498
        %v501 = vadd.f32 %v499, 0.0
        %v502 = vadd.f32 %v500, 0.0
        %vm503 = vcmp.le.f32.partialorder %v482, 1.7948966e-09
        %vm504 = vcmp.le.f32.partialorder %v484, 1.7948966e-09
        %v505 = vsel %vm503, 1, 0
        %v506 = vsel %vm504, 1, 0
        %v507 = vcvt.s32.f32 %v505
        %v508 = vcvt.s32.f32 %v506
        %v509 = vadd.f32 %v501, %v507
        %v510 = vadd.f32 %v502, %v508
        %vm511 = vcmp.le.f32.partialorder %v482, -0.70710677
        %vm512 = vcmp.le.f32.partialorder %v484, -0.70710677
        %v513 = vsel %vm511, 1, 0
        %v514 = vsel %vm512, 1, 0
        %v515 = vcvt.s32.f32 %v513
        %v516 = vcvt.s32.f32 %v514
        %v517 = vadd.f32 %v509, %v515
        %v518 = vadd.f32 %v510, %v516
        %vm519 = vcmp.le.f32.partialorder %v482, -1.0
        %vm520 = vcmp.le.f32.partialorder %v484, -1.0
        %v521 = vsel %vm519, 1, 0
        %v522 = vsel %vm520, 1, 0
        %v523 = vcvt.s32.f32 %v521
        %v524 = vcvt.s32.f32 %v522
        %v525 = vadd.f32 %v517, %v523
        %v526 = vadd.f32 %v518, %v524
        %v527 = vmul.f32 %v525, 0.5
        %v528 = vmul.f32 %v526, 0.5
        %v529 = vfloor.f32 %v527
        %v530 = vfloor.f32 %v528
        %v531 = vmul.f32 %v529, 2.0
        %v532 = vmul.f32 %v530, 2.0
        %v533 = vsub.f32 %v525, %v531
        %v534 = vsub.f32 %v526, %v532
        %v535 = vmul.f32 %v533, 2.0
        %v536 = vmul.f32 %v534, 2.0
        %v537 = vsub.f32 1.0, %v535
        %v538 = vsub.f32 1.0, %v536
        %v539 = vmul.f32 %v537, %v493
        %v540 = vmul.f32 %v538, %v494
        %v541 = vmul.f32 %v525, 2.0
        %v542 = vmul.f32 %v526, 2.0
        %v543 = vsub.f32 %v539, %v541
        %v544 = vsub.f32 %v540, %v542
        %v545 = vsub.f32 %v543, %v482
        %v546 = vsub.f32 %v544, %v484
        %v547 = vmul.f32 %v545, 0.001118747
        %v548 = vmul.f32 %v546, 0.001118747
        %v549 = vld [vmem:[%s328] sm:$0xff]
        %v550 = vld [vmem:[%s328 + $0x8] sm:$0xff]
        %v551 = vadd.f32 %v462, %v547
        %v552 = vadd.f32 %v463, %v548
        %v553 = vsel %vm477, %v551, %v462
        %v554 = vsel %vm478, %v552, %v463
        %556 = vset.pattern.permute.xlu0 0
        %557 = vperm.xlu0 %556, %v549
        %v558 = vpop.permute.xlu0 %557
        %561 = vset.pattern.permute.xlu0 0
        %562 = vperm.xlu0 %561, %v550
        %v563 = vpop.permute.xlu0 %562
        %v565 = vmul.f32 %v553, %v558
        %v566 = vmul.f32 %v554, %v563
        %567 = vst [vmem:[%s314] sm:$0xff] %v565
        %568 = vst [vmem:[%s314 + $0x8] sm:$0xff] %v566
        %s569 = sand.u32 %s174, 1
        %s570 = scalar_lea.sflag [#allocation4], %s569
        %s571 = sand.u32 %s174, 1
        %s572 = smul.addr %s571, 16
        %s573 = scalar_lea.vmem [#allocation5], %s572
        // Predicated region
        $region45: #{tpu_custom_call.1} parent=39 // pred_check
          %p574 = pneg %p184
        $region46: #{tpu_custom_call.1} parent=39 // pred_check_branch
          %576 = sbr.rel (%p574) target = $region48
        $region47: #{tpu_custom_call.1} parent=39 // pred_region
          %s577 = smul.u32 2, %s27
          %s579 = ssub.s32 256, 256
          %580 = vsyncadd %s570, %s579
          %s581 = smul.addr %s577, 2
          %s582 = sadd.s32 %s26, %s581
          %s583 = smul.addr %s582, 128
          %s584 = scalar_lea.hbm %s5, %s583
          %s585 = sshll.u32 %s573, 4
          %s586 = int_to_ptr.vmem [resolvable:$true] %s585
          %591 = dma.vmem_to_hbm [thread:$0]  %s586, 256, %s584, %s570, 128, 256, 8
        $region48: #{tpu_custom_call.1} parent=39 // pred_fallthru
          _
      $region40: #{tpu_custom_call.1} parent=5 // pred_fallthru
        _
      %p592 = scmp.le.s32.totalorder 2, %s17
      // Predicated region
      $region49: #{tpu_custom_call.1} parent=5 // pred_check
        %p593 = pneg %p592
      $region50: #{tpu_custom_call.1} parent=5 // pred_check_branch
        %595 = sbr.rel (%p593) target = $region52
      $region51: #{tpu_custom_call.1} parent=5 // pred_region
        %s596 = ssub.s32 %s17, 2
        // Predicated region
        $region53: #{tpu_custom_call.1} parent=51 // pred_check
          %p597 = pneg %p190
        $region54: #{tpu_custom_call.1} parent=51 // pred_check_branch
          %599 = sbr.rel (%p597) target = $region56
        $region55: #{tpu_custom_call.1} parent=51 // pred_region
          %s600 = sand.u32 %s175, 1
          %s601 = scalar_lea.sflag [#allocation4], %s600
          %s602 = sand.u32 %s175, 1
          %s603 = smul.addr %s602, 16
          %s604 = scalar_lea.vmem [#allocation5], %s603
          %605 = dma.done %s601, 256
        $region56: #{tpu_custom_call.1} parent=51 // pred_fallthru
          _
      $region52: #{tpu_custom_call.1} parent=5 // pred_fallthru
        _
    $region6: #{tpu_custom_call.1} parent=1 // loop_footer
      %s21 = sadd.s32 1, %s17
    $region7: #{tpu_custom_call.1} parent=1 // loop_footer_branch
      %16 = sbr.rel target = $region3
    $region8: #{tpu_custom_call.1} parent=1 // loop_exit
      _
    %606 = vsyncpa [#allocation3], 1
    %s607 = scalar_lea.sflag [#allocation3], 1
    %608 = vsyncpa %s607, 1
    %609 = vsyncpa [#allocation4], 1
    %s610 = scalar_lea.sflag [#allocation4], 1
    %611 = vsyncpa %s610, 1

</llo_original>
